<compile_context>
chip_gen: v6e
topology: v6e:2x2x1
jax: 0.10.0
libtpu: 0.0.40
codegen_flags: <defaults>
</compile_context>

<pallas_src>
import functools

import jax
import jax.numpy as jnp
from jax.experimental import pallas as pl
from jax.experimental.pallas import tpu as pltpu

IN_FEATURES = 768
_LANE = 128      # vreg lane width  -> last-dim granularity
_SUBLANE = 8     # vreg sublane     -> second-to-last-dim granularity


def _round_up(x, m):
    return (x + m - 1) // m * m


def _cdiv(a, b):
    return (a + b - 1) // b


def mlp_kernel(x_ref, w1_ref, b1_ref, w2_ref, b2_ref, o_ref):
    # fc1 + relu + fc2 for one batch tile; both matmuls accumulate in f32 on the MXU.
    x = x_ref[...]                                                  # (tb, 768)
    h = jnp.dot(x, w1_ref[...], preferred_element_type=jnp.float32)
    h = jnp.maximum(h + b1_ref[...], 0.0)                           # (tb, Hp) f32
    y = jnp.dot(h.astype(w2_ref.dtype), w2_ref[...],
                preferred_element_type=jnp.float32)
    y = y + b2_ref[...]                                             # (tb, Cp) f32
    o_ref[...] = y.astype(o_ref.dtype)


@functools.partial(jax.jit, static_argnames=("tile_b", "compute_dtype"))
def mlp_forward(x, w1, b1, w2, b2, *, tile_b=256, compute_dtype=None):
    B, D = x.shape
    assert D == IN_FEATURES
    H = w1.shape[1]
    C = w2.shape[1]
    out_dtype = x.dtype

    # Optional low-precision compute path (v5e/v6e/v7x MXUs are bf16-native).
    if compute_dtype is not None:
        x = x.astype(compute_dtype)
        w1 = w1.astype(compute_dtype)
        w2 = w2.astype(compute_dtype)
    b1 = jnp.asarray(b1, jnp.float32).reshape(1, H)
    b2 = jnp.asarray(b2, jnp.float32).reshape(1, C)

    # ---- lane-dense padding of hidden / class dims (multiples of 128) --------
    Hp = _round_up(H, _LANE)
    Cp = _round_up(C, _LANE)
    if Hp != H:
        w1 = jnp.pad(w1, ((0, 0), (0, Hp - H)))
        b1 = jnp.pad(b1, ((0, 0), (0, Hp - H)))
        w2 = jnp.pad(w2, ((0, Hp - H), (0, 0)))
    if Cp != C:
        w2 = jnp.pad(w2, ((0, 0), (0, Cp - C)))
        b2 = jnp.pad(b2, ((0, 0), (0, Cp - C)))

    # ---- batch tiling: big MXU-filling tiles, any batch size ------------------
    tb = min(tile_b, _round_up(B, _SUBLANE))
    if B <= tile_b and B >= 2 * _LANE:
        # whole batch would be one grid step: split in two so both v7x
        # TensorCores get work along the "parallel" axis (free on v5e/v6e).
        tb = _round_up(_cdiv(B, 2), _SUBLANE)
    tb = _round_up(tb, _SUBLANE)
    n_tiles = _cdiv(B, tb)
    Bp = n_tiles * tb
    if Bp != B:
        x = jnp.pad(x, ((0, Bp - B), (0, 0)))

    # ---- VMEM budget (double-buffered streams + resident weights) -------------
    def _nbytes(a):
        return int(a.size) * a.dtype.itemsize

    resident = _nbytes(w1) + _nbytes(b1) + _nbytes(w2) + _nbytes(b2)
    streamed = tb * D * x.dtype.itemsize + tb * Cp * jnp.dtype(out_dtype).itemsize
    scratch_h = tb * Hp * 4                      # f32 fc1 activations
    need = 2 * (resident + streamed) + scratch_h
    vmem_limit = None
    if need > 16 * 2**20:                        # above v5e's conservative default
        vmem_limit = int(min(need * 5 // 4, 64 * 2**20))   # fits v7x's 64 MiB too

    cost = pl.CostEstimate(
        flops=2 * Bp * (D * Hp + Hp * Cp),
        transcendentals=0,
        bytes_accessed=int(resident + _nbytes(x)
                           + Bp * Cp * jnp.dtype(out_dtype).itemsize),
    )

    out = pl.pallas_call(
        mlp_kernel,
        out_shape=jax.ShapeDtypeStruct((Bp, Cp), out_dtype),
        grid_spec=pltpu.PrefetchScalarGridSpec(
            num_scalar_prefetch=0,
            grid=(n_tiles,),
            in_specs=[
                pl.BlockSpec((tb, D), lambda i: (i, 0)),     # x tile (streamed)
                pl.BlockSpec((D, Hp), lambda i: (0, 0)),     # W1 (resident)
                pl.BlockSpec((1, Hp), lambda i: (0, 0)),     # b1 (resident)
                pl.BlockSpec((Hp, Cp), lambda i: (0, 0)),    # W2 (resident)
                pl.BlockSpec((1, Cp), lambda i: (0, 0)),     # b2 (resident)
            ],
            out_specs=pl.BlockSpec((tb, Cp), lambda i: (i, 0)),
        ),
        compiler_params=pltpu.CompilerParams(
            dimension_semantics=("parallel",),
            vmem_limit_bytes=vmem_limit,
        ),
        cost_estimate=cost,
    )(x, w1, b1, w2, b2)

    return out[:B, :C]


def init_params(key, hidden_size, classes, dtype=jnp.float32):
    # Deterministic init mirroring nn.Linear's default U(-1/sqrt(fan_in), +1/sqrt(fan_in)).
    k1, k2, k3, k4 = jax.random.split(key, 4)
    bound1 = 1.0 / jnp.sqrt(IN_FEATURES)
    bound2 = 1.0 / jnp.sqrt(hidden_size)
    w1 = jax.random.uniform(k1, (IN_FEATURES, hidden_size), dtype, -bound1, bound1)
    b1 = jax.random.uniform(k2, (hidden_size,), dtype, -bound1, bound1)
    w2 = jax.random.uniform(k3, (hidden_size, classes), dtype, -bound2, bound2)
    b2 = jax.random.uniform(k4, (classes,), dtype, -bound2, bound2)
    return w1, b1, w2, b2


if __name__ == "__main__":
    hidden_size, classes = 32, 10
    key = jax.random.PRNGKey(0)
    kx, kp, kx2 = jax.random.split(key, 3)
    w1, b1, w2, b2 = init_params(kp, hidden_size, classes)

    def ref_fn(xx):
        return jnp.maximum(xx @ w1 + b1, 0.0) @ w2 + b2

    # Small batch (single tile).
    x = jax.random.normal(kx, (8, IN_FEATURES), jnp.float32)
    out = mlp_forward(x, w1, b1, w2, b2)
    jax.block_until_ready(out)
    assert out.shape == (8, classes)
    assert jnp.allclose(out, ref_fn(x), atol=1e-4, rtol=1e-4)

    # Non-divisible batch exercises the cdiv grid + padding/masking path.
    x2 = jax.random.normal(kx2, (13, IN_FEATURES), jnp.float32)
    out2 = mlp_forward(x2, w1, b1, w2, b2)
    jax.block_until_ready(out2)
    assert out2.shape == (13, classes)
    assert jnp.allclose(out2, ref_fn(x2), atol=1e-4, rtol=1e-4)

    print("KERNEL_OK")
</pallas_src>

<mosaic_0001>
module attributes {stable_mosaic.version = 11 : i64} {
  func.func @mlp_kernel(%arg0: i32, %arg1: memref<8x768xf32, #tpu.memory_space<vmem>>, %arg2: memref<768x128xf32, #tpu.memory_space<vmem>>, %arg3: memref<1x128xf32, #tpu.memory_space<vmem>>, %arg4: memref<128x128xf32, #tpu.memory_space<vmem>>, %arg5: memref<1x128xf32, #tpu.memory_space<vmem>>, %arg6: memref<8x128xf32, #tpu.memory_space<vmem>>) attributes {dimension_semantics = [#tpu.dimension_semantics<parallel>], iteration_bounds = array<i64: 1>, scalar_prefetch = 0 : i64, scratch_operands = 0 : i64, tpu.core_type = #tpu.core_type<tc>, window_params = [{transform_indices = @transform_0, window_bounds = array<i64: 8, 768>}, {pipeline_mode = #tpu.pipeline_mode<synchronous>, transform_indices = @transform_1, window_bounds = array<i64: 768, 128>}, {pipeline_mode = #tpu.pipeline_mode<synchronous>, transform_indices = @transform_2, window_bounds = array<i64: 1, 128>}, {pipeline_mode = #tpu.pipeline_mode<synchronous>, transform_indices = @transform_3, window_bounds = array<i64: 128, 128>}, {pipeline_mode = #tpu.pipeline_mode<synchronous>, transform_indices = @transform_4, window_bounds = array<i64: 1, 128>}, {transform_indices = @transform_5, window_bounds = array<i64: 8, 128>}]} {
    %c0 = arith.constant 0 : index
    %c0_0 = arith.constant 0 : index
    %0 = vector.load %arg1[%c0, %c0_0] : memref<8x768xf32, #tpu.memory_space<vmem>>, vector<8x768xf32>
    %c0_1 = arith.constant 0 : index
    %c0_2 = arith.constant 0 : index
    %1 = vector.load %arg2[%c0_1, %c0_2] : memref<768x128xf32, #tpu.memory_space<vmem>>, vector<768x128xf32>
    %cst = arith.constant dense<0.000000e+00> : vector<8x128xf32>
    %2 = tpu.matmul %0, %1, %cst {dimension_numbers = #tpu.dot_dimension_numbers<[1], [0], [0], [1], [0, 0, 1, 1], [], []>} : vector<8x768xf32>, vector<768x128xf32>, vector<8x128xf32> -> vector<8x128xf32>
    %c0_3 = arith.constant 0 : index
    %c0_4 = arith.constant 0 : index
    %3 = vector.load %arg3[%c0_3, %c0_4] : memref<1x128xf32, #tpu.memory_space<vmem>>, vector<1x128xf32>
    %4 = vector.broadcast %3 : vector<1x128xf32> to vector<8x128xf32>
    %5 = arith.addf %2, %4 : vector<8x128xf32>
    %cst_5 = arith.constant 0.000000e+00 : f32
    %6 = vector.broadcast %cst_5 : f32 to vector<8x128xf32>
    %7 = arith.maximumf %5, %6 : vector<8x128xf32>
    %c0_6 = arith.constant 0 : index
    %c0_7 = arith.constant 0 : index
    %8 = vector.load %arg4[%c0_6, %c0_7] : memref<128x128xf32, #tpu.memory_space<vmem>>, vector<128x128xf32>
    %cst_8 = arith.constant dense<0.000000e+00> : vector<8x128xf32>
    %9 = tpu.matmul %7, %8, %cst_8 {dimension_numbers = #tpu.dot_dimension_numbers<[1], [0], [0], [1], [0, 0, 1, 1], [], []>} : vector<8x128xf32>, vector<128x128xf32>, vector<8x128xf32> -> vector<8x128xf32>
    %c0_9 = arith.constant 0 : index
    %c0_10 = arith.constant 0 : index
    %10 = vector.load %arg5[%c0_9, %c0_10] : memref<1x128xf32, #tpu.memory_space<vmem>>, vector<1x128xf32>
    %11 = vector.broadcast %10 : vector<1x128xf32> to vector<8x128xf32>
    %12 = arith.addf %9, %11 : vector<8x128xf32>
    %c0_11 = arith.constant 0 : index
    %c0_12 = arith.constant 0 : index
    %13 = vector.load %arg6[%c0_11, %c0_12] : memref<8x128xf32, #tpu.memory_space<vmem>>, vector<8x128xf32>
    tpu.vector_store %arg6[%c0_11, %c0_12], %12 {strides = array<i32>} : memref<8x128xf32, #tpu.memory_space<vmem>>, vector<8x128xf32>,
    return
  }
  func.func @transform_0(%arg0: i32) -> (i32, i32) {
    %c0_i32 = arith.constant 0 : i32
    %c0_i32_0 = arith.constant 0 : i32
    return %arg0, %c0_i32 : i32, i32
  }
  func.func @transform_1(%arg0: i32) -> (i32, i32) {
    %c0_i32 = arith.constant 0 : i32
    %c0_i32_0 = arith.constant 0 : i32
    %c0_i32_1 = arith.constant 0 : i32
    return %c0_i32, %c0_i32_0 : i32, i32
  }
  func.func @transform_2(%arg0: i32) -> (i32, i32) {
    %c0_i32 = arith.constant 0 : i32
    %c0_i32_0 = arith.constant 0 : i32
    %c0_i32_1 = arith.constant 0 : i32
    return %c0_i32, %c0_i32_0 : i32, i32
  }
  func.func @transform_3(%arg0: i32) -> (i32, i32) {
    %c0_i32 = arith.constant 0 : i32
    %c0_i32_0 = arith.constant 0 : i32
    %c0_i32_1 = arith.constant 0 : i32
    return %c0_i32, %c0_i32_0 : i32, i32
  }
  func.func @transform_4(%arg0: i32) -> (i32, i32) {
    %c0_i32 = arith.constant 0 : i32
    %c0_i32_0 = arith.constant 0 : i32
    %c0_i32_1 = arith.constant 0 : i32
    return %c0_i32, %c0_i32_0 : i32, i32
  }
  func.func @transform_5(%arg0: i32) -> (i32, i32) {
    %c0_i32 = arith.constant 0 : i32
    %c0_i32_0 = arith.constant 0 : i32
    return %arg0, %c0_i32 : i32, i32
  }
}

</mosaic_0001>

<llo_original>
// kernel: mlp_forward.1
$region0: #{mlp_forward.1}
  #allocation0 [shape = 'u32[]', space=smem, size = 0x4, offset = 0x4, fixed_abs, tag = 'smem constant byte address 0x4 - core index']
  #allocation1 [shape = 'u32[144,128]{1,0:T(1,128)}', space=vmem, size = 0x12000, scoped, tag = 'internal scratch']
  %s0 = inlined_call_operand.vmem [shape: f32[8,768], index: 0, kind: input, shape index: {}]
  %s1 = inlined_call_operand.vmem [shape: f32[768,128], index: 1, kind: input, shape index: {}]
  %s2 = inlined_call_operand.vmem [shape: f32[1,128], index: 2, kind: input, shape index: {}]
  %s3 = inlined_call_operand.vmem [shape: f32[128,128], index: 3, kind: input, shape index: {}]
  %s4 = inlined_call_operand.vmem [shape: f32[1,128], index: 4, kind: input, shape index: {}]
  %s5 = inlined_call_operand.hbm [shape: f32[8,128], index: 5, kind: output, shape index: {}]
  %s6 = sld [smem:[#allocation0]]
  $region30: #{mlp_forward.1} parent=0
    _
  %s8 = ssub.s32 1, %s6
  %s9 = scalar_select 0, %s8, %s6
  $region1: #{mlp_forward.1} parent=0
    #allocation2 [shape = 'u8[4096]{0}', space=vmem, size = 0x1000, scoped, tag = 'output window, operand 0, single buffered']
    #allocation3 [shape = 's32[1]{0}', space=sflag, size = 0x4, scoped, tag = 'scoped memory for mlp_forward.1']
    %10 = vsyncpa [#allocation3], 0
    // Predicated region
    $region2: #{mlp_forward.1} parent=1 // pred_check
      _
    $region3: #{mlp_forward.1} parent=1 // pred_check_branch
      %12 = sbr.rel (0) target = $region5
    $region4: #{mlp_forward.1} parent=1 // pred_region
      _
    $region5: #{mlp_forward.1} parent=1 // pred_fallthru
      _
    // Predicated region
    $region6: #{mlp_forward.1} parent=1 // pred_check
      _
    $region7: #{mlp_forward.1} parent=1 // pred_check_branch
      %14 = sbr.rel (0) target = $region9
    $region8: #{mlp_forward.1} parent=1 // pred_region
      _
    $region9: #{mlp_forward.1} parent=1 // pred_fallthru
      _
    // Predicated region
    $region10: #{mlp_forward.1} parent=1 // pred_check
      _
    $region11: #{mlp_forward.1} parent=1 // pred_check_branch
      %16 = sbr.rel (0) target = $region13
    $region12: #{mlp_forward.1} parent=1 // pred_region
      _
    $region13: #{mlp_forward.1} parent=1 // pred_fallthru
      _
    // Predicated region
    $region14: #{mlp_forward.1} parent=1 // pred_check
      _
    $region15: #{mlp_forward.1} parent=1 // pred_check_branch
      %18 = sbr.rel (0) target = $region17
    $region16: #{mlp_forward.1} parent=1 // pred_region
      _
    $region17: #{mlp_forward.1} parent=1 // pred_fallthru
      _
    // Predicated region
    $region18: #{mlp_forward.1} parent=1 // pred_check
      _
    $region19: #{mlp_forward.1} parent=1 // pred_check_branch
      %20 = sbr.rel (0) target = $region21
    $region20: #{mlp_forward.1} parent=1 // pred_region
      _
    $region21: #{mlp_forward.1} parent=1 // pred_fallthru
      _
    %v21 = vld [vmem:[%s0] sm:$0xff]
    %v22 = vld [vmem:[%s0 + $0x8] sm:$0xff]
    %v23 = vld [vmem:[%s0 + $0x10] sm:$0xff]
    %v24 = vld [vmem:[%s0 + $0x18] sm:$0xff]
    %v25 = vld [vmem:[%s0 + $0x20] sm:$0xff]
    %v26 = vld [vmem:[%s0 + $0x28] sm:$0xff]
    %v27 = vld [vmem:[%s1] sm:$0xff]
    %v28 = vld [vmem:[%s1 + $0x8] sm:$0xff]
    %v29 = vld [vmem:[%s1 + $0x10] sm:$0xff]
    %v30 = vld [vmem:[%s1 + $0x18] sm:$0xff]
    %v31 = vld [vmem:[%s1 + $0x20] sm:$0xff]
    %v32 = vld [vmem:[%s1 + $0x28] sm:$0xff]
    %v33 = vld [vmem:[%s1 + $0x30] sm:$0xff]
    %v34 = vld [vmem:[%s1 + $0x38] sm:$0xff]
    %v35 = vld [vmem:[%s1 + $0x40] sm:$0xff]
    %v36 = vld [vmem:[%s1 + $0x48] sm:$0xff]
    %v37 = vld [vmem:[%s1 + $0x50] sm:$0xff]
    %v38 = vld [vmem:[%s1 + $0x58] sm:$0xff]
    %v39 = vld [vmem:[%s1 + $0x60] sm:$0xff]
    %v40 = vld [vmem:[%s1 + $0x68] sm:$0xff]
    %v41 = vld [vmem:[%s1 + $0x70] sm:$0xff]
    %v42 = vld [vmem:[%s1 + $0x78] sm:$0xff]
    %v43 = vld [vmem:[%s1 + $0x80] sm:$0xff]
    %v44 = vld [vmem:[%s1 + $0x88] sm:$0xff]
    %v45 = vld [vmem:[%s1 + $0x90] sm:$0xff]
    %v46 = vld [vmem:[%s1 + $0x98] sm:$0xff]
    %v47 = vld [vmem:[%s1 + $0xa0] sm:$0xff]
    %v48 = vld [vmem:[%s1 + $0xa8] sm:$0xff]
    %v49 = vld [vmem:[%s1 + $0xb0] sm:$0xff]
    %v50 = vld [vmem:[%s1 + $0xb8] sm:$0xff]
    %v51 = vld [vmem:[%s1 + $0xc0] sm:$0xff]
    %v52 = vld [vmem:[%s1 + $0xc8] sm:$0xff]
    %v53 = vld [vmem:[%s1 + $0xd0] sm:$0xff]
    %v54 = vld [vmem:[%s1 + $0xd8] sm:$0xff]
    %v55 = vld [vmem:[%s1 + $0xe0] sm:$0xff]
    %v56 = vld [vmem:[%s1 + $0xe8] sm:$0xff]
    %v57 = vld [vmem:[%s1 + $0xf0] sm:$0xff]
    %v58 = vld [vmem:[%s1 + $0xf8] sm:$0xff]
    %v59 = vld [vmem:[%s1 + $0x100] sm:$0xff]
    %v60 = vld [vmem:[%s1 + $0x108] sm:$0xff]
    %v61 = vld [vmem:[%s1 + $0x110] sm:$0xff]
    %v62 = vld [vmem:[%s1 + $0x118] sm:$0xff]
    %v63 = vld [vmem:[%s1 + $0x120] sm:$0xff]
    %v64 = vld [vmem:[%s1 + $0x128] sm:$0xff]
    %v65 = vld [vmem:[%s1 + $0x130] sm:$0xff]
    %v66 = vld [vmem:[%s1 + $0x138] sm:$0xff]
    %v67 = vld [vmem:[%s1 + $0x140] sm:$0xff]
    %v68 = vld [vmem:[%s1 + $0x148] sm:$0xff]
    %v69 = vld [vmem:[%s1 + $0x150] sm:$0xff]
    %v70 = vld [vmem:[%s1 + $0x158] sm:$0xff]
    %v71 = vld [vmem:[%s1 + $0x160] sm:$0xff]
    %v72 = vld [vmem:[%s1 + $0x168] sm:$0xff]
    %v73 = vld [vmem:[%s1 + $0x170] sm:$0xff]
    %v74 = vld [vmem:[%s1 + $0x178] sm:$0xff]
    %v75 = vld [vmem:[%s1 + $0x180] sm:$0xff]
    %v76 = vld [vmem:[%s1 + $0x188] sm:$0xff]
    %v77 = vld [vmem:[%s1 + $0x190] sm:$0xff]
    %v78 = vld [vmem:[%s1 + $0x198] sm:$0xff]
    %v79 = vld [vmem:[%s1 + $0x1a0] sm:$0xff]
    %v80 = vld [vmem:[%s1 + $0x1a8] sm:$0xff]
    %v81 = vld [vmem:[%s1 + $0x1b0] sm:$0xff]
    %v82 = vld [vmem:[%s1 + $0x1b8] sm:$0xff]
    %v83 = vld [vmem:[%s1 + $0x1c0] sm:$0xff]
    %v84 = vld [vmem:[%s1 + $0x1c8] sm:$0xff]
    %v85 = vld [vmem:[%s1 + $0x1d0] sm:$0xff]
    %v86 = vld [vmem:[%s1 + $0x1d8] sm:$0xff]
    %v87 = vld [vmem:[%s1 + $0x1e0] sm:$0xff]
    %v88 = vld [vmem:[%s1 + $0x1e8] sm:$0xff]
    %v89 = vld [vmem:[%s1 + $0x1f0] sm:$0xff]
    %v90 = vld [vmem:[%s1 + $0x1f8] sm:$0xff]
    %v91 = vld [vmem:[%s1 + $0x200] sm:$0xff]
    %v92 = vld [vmem:[%s1 + $0x208] sm:$0xff]
    %v93 = vld [vmem:[%s1 + $0x210] sm:$0xff]
    %v94 = vld [vmem:[%s1 + $0x218] sm:$0xff]
    %v95 = vld [vmem:[%s1 + $0x220] sm:$0xff]
    %v96 = vld [vmem:[%s1 + $0x228] sm:$0xff]
    %v97 = vld [vmem:[%s1 + $0x230] sm:$0xff]
    %v98 = vld [vmem:[%s1 + $0x238] sm:$0xff]
    %v99 = vld [vmem:[%s1 + $0x240] sm:$0xff]
    %v100 = vld [vmem:[%s1 + $0x248] sm:$0xff]
    %v101 = vld [vmem:[%s1 + $0x250] sm:$0xff]
    %v102 = vld [vmem:[%s1 + $0x258] sm:$0xff]
    %v103 = vld [vmem:[%s1 + $0x260] sm:$0xff]
    %v104 = vld [vmem:[%s1 + $0x268] sm:$0xff]
    %v105 = vld [vmem:[%s1 + $0x270] sm:$0xff]
    %v106 = vld [vmem:[%s1 + $0x278] sm:$0xff]
    %v107 = vld [vmem:[%s1 + $0x280] sm:$0xff]
    %v108 = vld [vmem:[%s1 + $0x288] sm:$0xff]
    %v109 = vld [vmem:[%s1 + $0x290] sm:$0xff]
    %v110 = vld [vmem:[%s1 + $0x298] sm:$0xff]
    %v111 = vld [vmem:[%s1 + $0x2a0] sm:$0xff]
    %v112 = vld [vmem:[%s1 + $0x2a8] sm:$0xff]
    %v113 = vld [vmem:[%s1 + $0x2b0] sm:$0xff]
    %v114 = vld [vmem:[%s1 + $0x2b8] sm:$0xff]
    %v115 = vld [vmem:[%s1 + $0x2c0] sm:$0xff]
    %v116 = vld [vmem:[%s1 + $0x2c8] sm:$0xff]
    %v117 = vld [vmem:[%s1 + $0x2d0] sm:$0xff]
    %v118 = vld [vmem:[%s1 + $0x2d8] sm:$0xff]
    %v119 = vld [vmem:[%s1 + $0x2e0] sm:$0xff]
    %v120 = vld [vmem:[%s1 + $0x2e8] sm:$0xff]
    %v121 = vld [vmem:[%s1 + $0x2f0] sm:$0xff]
    %v122 = vld [vmem:[%s1 + $0x2f8] sm:$0xff]
    %v123 = vld [vmem:[%s2] sm:$0x1]
    %v125 = vlaneseq
    %v126 = vshrl.u32 %v125, 7
    %v127 = vsub.s32 0, %v126
    %v128 = vrot.slane %v123, %v127
    %130 = vmatprep.subr.mxu0 0.0
    %131 = vmatpush1.msra.mxu0 %v42
    %132 = vmatprep.subr.mxu0 0.0
    %133 = vmatpush1.msra.mxu0 %v41
    %134 = vmatprep.subr.mxu0 0.0
    %135 = vmatpush1.msra.mxu0 %v40
    %136 = vmatprep.subr.mxu0 0.0
    %137 = vmatpush1.msra.mxu0 %v39
    %138 = vmatprep.subr.mxu0 0.0
    %139 = vmatpush1.msra.mxu0 %v38
    %140 = vmatprep.subr.mxu0 0.0
    %141 = vmatpush1.msra.mxu0 %v37
    %142 = vmatprep.subr.mxu0 0.0
    %143 = vmatpush1.msra.mxu0 %v36
    %144 = vmatprep.subr.mxu0 0.0
    %145 = vmatpush1.msra.mxu0 %v35
    %146 = vmatprep.subr.mxu0 0.0
    %147 = vmatpush1.msra.mxu0 %v34
    %148 = vmatprep.subr.mxu0 0.0
    %149 = vmatpush1.msra.mxu0 %v33
    %150 = vmatprep.subr.mxu0 0.0
    %151 = vmatpush1.msra.mxu0 %v32
    %152 = vmatprep.subr.mxu0 0.0
    %153 = vmatpush1.msra.mxu0 %v31
    %154 = vmatprep.subr.mxu0 0.0
    %155 = vmatpush1.msra.mxu0 %v30
    %156 = vmatprep.subr.mxu0 0.0
    %157 = vmatpush1.msra.mxu0 %v29
    %158 = vmatprep.subr.mxu0 0.0
    %159 = vmatpush1.msra.mxu0 %v28
    %160 = vmatprep.subr.mxu0 0.0
    %161 = vmatpush1.msra.mxu0 %v27
    %162 = vmatprep.subr.mxu0 0.0
    %163 = vmatpush2.msra.mxu0 %v58
    %164 = vmatprep.subr.mxu0 0.0
    %165 = vmatpush2.msra.mxu0 %v57
    %166 = vmatprep.subr.mxu0 0.0
    %167 = vmatpush2.msra.mxu0 %v56
    %168 = vmatprep.subr.mxu0 0.0
    %169 = vmatpush2.msra.mxu0 %v55
    %170 = vmatprep.subr.mxu0 0.0
    %171 = vmatpush2.msra.mxu0 %v54
    %172 = vmatprep.subr.mxu0 0.0
    %173 = vmatpush2.msra.mxu0 %v53
    %174 = vmatprep.subr.mxu0 0.0
    %175 = vmatpush2.msra.mxu0 %v52
    %176 = vmatprep.subr.mxu0 0.0
    %177 = vmatpush2.msra.mxu0 %v51
    %178 = vmatprep.subr.mxu0 0.0
    %179 = vmatpush2.msra.mxu0 %v50
    %180 = vmatprep.subr.mxu0 0.0
    %181 = vmatpush2.msra.mxu0 %v49
    %182 = vmatprep.subr.mxu0 0.0
    %183 = vmatpush2.msra.mxu0 %v48
    %184 = vmatprep.subr.mxu0 0.0
    %185 = vmatpush2.msra.mxu0 %v47
    %186 = vmatprep.subr.mxu0 0.0
    %187 = vmatpush2.msra.mxu0 %v46
    %188 = vmatprep.subr.mxu0 0.0
    %189 = vmatpush2.msra.mxu0 %v45
    %190 = vmatprep.subr.mxu0 0.0
    %191 = vmatpush2.msra.mxu0 %v44
    %192 = vmatprep.subr.mxu0 0.0
    %193 = vmatpush2.msra.mxu0 %v43
    %194 = vmatprep.mubr.f32.mxu0 %v22
    %195 = vmatmul.mubr.f32.gmra.mxu0 %v21
    %v196 = vpop.f32.mrf.mxu0
    %v197 = vadd.f32 %v128, %v196
    %v198 = vpop.f32.mrf.mxu0
    %199 = vdwg.mxu0
    %200 = vmatprep.subr.mxu0 0.0
    %201 = vmatpush1.msra.mxu0 %v74
    %202 = vmatprep.subr.mxu0 0.0
    %203 = vmatpush1.msra.mxu0 %v73
    %204 = vmatprep.subr.mxu0 0.0
    %205 = vmatpush1.msra.mxu0 %v72
    %206 = vmatprep.subr.mxu0 0.0
    %207 = vmatpush1.msra.mxu0 %v71
    %208 = vmatprep.subr.mxu0 0.0
    %209 = vmatpush1.msra.mxu0 %v70
    %210 = vmatprep.subr.mxu0 0.0
    %211 = vmatpush1.msra.mxu0 %v69
    %212 = vmatprep.subr.mxu0 0.0
    %213 = vmatpush1.msra.mxu0 %v68
    %214 = vmatprep.subr.mxu0 0.0
    %215 = vmatpush1.msra.mxu0 %v67
    %216 = vmatprep.subr.mxu0 0.0
    %217 = vmatpush1.msra.mxu0 %v66
    %218 = vmatprep.subr.mxu0 0.0
    %219 = vmatpush1.msra.mxu0 %v65
    %220 = vmatprep.subr.mxu0 0.0
    %221 = vmatpush1.msra.mxu0 %v64
    %222 = vmatprep.subr.mxu0 0.0
    %223 = vmatpush1.msra.mxu0 %v63
    %224 = vmatprep.subr.mxu0 0.0
    %225 = vmatpush1.msra.mxu0 %v62
    %226 = vmatprep.subr.mxu0 0.0
    %227 = vmatpush1.msra.mxu0 %v61
    %228 = vmatprep.subr.mxu0 0.0
    %229 = vmatpush1.msra.mxu0 %v60
    %230 = vmatprep.subr.mxu0 0.0
    %231 = vmatpush1.msra.mxu0 %v59
    %232 = vmatprep.subr.mxu0 0.0
    %233 = vmatpush2.msra.mxu0 %v90
    %234 = vmatprep.subr.mxu0 0.0
    %235 = vmatpush2.msra.mxu0 %v89
    %236 = vmatprep.subr.mxu0 0.0
    %237 = vmatpush2.msra.mxu0 %v88
    %238 = vmatprep.subr.mxu0 0.0
    %239 = vmatpush2.msra.mxu0 %v87
    %240 = vmatprep.subr.mxu0 0.0
    %241 = vmatpush2.msra.mxu0 %v86
    %242 = vmatprep.subr.mxu0 0.0
    %243 = vmatpush2.msra.mxu0 %v85
    %244 = vmatprep.subr.mxu0 0.0
    %245 = vmatpush2.msra.mxu0 %v84
    %246 = vmatprep.subr.mxu0 0.0
    %247 = vmatpush2.msra.mxu0 %v83
    %248 = vmatprep.subr.mxu0 0.0
    %249 = vmatpush2.msra.mxu0 %v82
    %250 = vmatprep.subr.mxu0 0.0
    %251 = vmatpush2.msra.mxu0 %v81
    %252 = vmatprep.subr.mxu0 0.0
    %253 = vmatpush2.msra.mxu0 %v80
    %254 = vmatprep.subr.mxu0 0.0
    %255 = vmatpush2.msra.mxu0 %v79
    %256 = vmatprep.subr.mxu0 0.0
    %257 = vmatpush2.msra.mxu0 %v78
    %258 = vmatprep.subr.mxu0 0.0
    %259 = vmatpush2.msra.mxu0 %v77
    %260 = vmatprep.subr.mxu0 0.0
    %261 = vmatpush2.msra.mxu0 %v76
    %262 = vmatprep.subr.mxu0 0.0
    %263 = vmatpush2.msra.mxu0 %v75
    %264 = vmatprep.mubr.f32.mxu0 %v24
    %265 = vmatmul.mubr.f32.gmra.mxu0 %v23
    %v266 = vpop.f32.mrf.mxu0
    %v267 = vadd.f32 %v197, %v266
    %v268 = vpop.f32.mrf.mxu0
    %269 = vdwg.mxu0
    %270 = vmatprep.subr.mxu0 0.0
    %271 = vmatpush1.msra.mxu0 %v106
    %272 = vmatprep.subr.mxu0 0.0
    %273 = vmatpush1.msra.mxu0 %v105
    %274 = vmatprep.subr.mxu0 0.0
    %275 = vmatpush1.msra.mxu0 %v104
    %276 = vmatprep.subr.mxu0 0.0
    %277 = vmatpush1.msra.mxu0 %v103
    %278 = vmatprep.subr.mxu0 0.0
    %279 = vmatpush1.msra.mxu0 %v102
    %280 = vmatprep.subr.mxu0 0.0
    %281 = vmatpush1.msra.mxu0 %v101
    %282 = vmatprep.subr.mxu0 0.0
    %283 = vmatpush1.msra.mxu0 %v100
    %284 = vmatprep.subr.mxu0 0.0
    %285 = vmatpush1.msra.mxu0 %v99
    %286 = vmatprep.subr.mxu0 0.0
    %287 = vmatpush1.msra.mxu0 %v98
    %288 = vmatprep.subr.mxu0 0.0
    %289 = vmatpush1.msra.mxu0 %v97
    %290 = vmatprep.subr.mxu0 0.0
    %291 = vmatpush1.msra.mxu0 %v96
    %292 = vmatprep.subr.mxu0 0.0
    %293 = vmatpush1.msra.mxu0 %v95
    %294 = vmatprep.subr.mxu0 0.0
    %295 = vmatpush1.msra.mxu0 %v94
    %296 = vmatprep.subr.mxu0 0.0
    %297 = vmatpush1.msra.mxu0 %v93
    %298 = vmatprep.subr.mxu0 0.0
    %299 = vmatpush1.msra.mxu0 %v92
    %300 = vmatprep.subr.mxu0 0.0
    %301 = vmatpush1.msra.mxu0 %v91
    %302 = vmatprep.subr.mxu0 0.0
    %303 = vmatpush2.msra.mxu0 %v122
    %304 = vmatprep.subr.mxu0 0.0
    %305 = vmatpush2.msra.mxu0 %v121
    %306 = vmatprep.subr.mxu0 0.0
    %307 = vmatpush2.msra.mxu0 %v120
    %308 = vmatprep.subr.mxu0 0.0
    %309 = vmatpush2.msra.mxu0 %v119
    %310 = vmatprep.subr.mxu0 0.0
    %311 = vmatpush2.msra.mxu0 %v118
    %312 = vmatprep.subr.mxu0 0.0
    %313 = vmatpush2.msra.mxu0 %v117
    %314 = vmatprep.subr.mxu0 0.0
    %315 = vmatpush2.msra.mxu0 %v116
    %316 = vmatprep.subr.mxu0 0.0
    %317 = vmatpush2.msra.mxu0 %v115
    %318 = vmatprep.subr.mxu0 0.0
    %319 = vmatpush2.msra.mxu0 %v114
    %320 = vmatprep.subr.mxu0 0.0
    %321 = vmatpush2.msra.mxu0 %v113
    %322 = vmatprep.subr.mxu0 0.0
    %323 = vmatpush2.msra.mxu0 %v112
    %324 = vmatprep.subr.mxu0 0.0
    %325 = vmatpush2.msra.mxu0 %v111
    %326 = vmatprep.subr.mxu0 0.0
    %327 = vmatpush2.msra.mxu0 %v110
    %328 = vmatprep.subr.mxu0 0.0
    %329 = vmatpush2.msra.mxu0 %v109
    %330 = vmatprep.subr.mxu0 0.0
    %331 = vmatpush2.msra.mxu0 %v108
    %332 = vmatprep.subr.mxu0 0.0
    %333 = vmatpush2.msra.mxu0 %v107
    %334 = vmatprep.mubr.f32.mxu0 %v26
    %335 = vmatmul.mubr.f32.gmra.mxu0 %v25
    %v336 = vpop.f32.mrf.mxu0
    %v337 = vadd.f32 %v267, %v336
    %v338 = vpop.f32.mrf.mxu0
    %339 = vdwg.mxu0
    %v340 = vmax.f32 %v337, 0.0
    %v341 = vld [vmem:[%s3] sm:$0xff]
    %v342 = vld [vmem:[%s3 + $0x8] sm:$0xff]
    %v343 = vld [vmem:[%s3 + $0x10] sm:$0xff]
    %v344 = vld [vmem:[%s3 + $0x18] sm:$0xff]
    %v345 = vld [vmem:[%s3 + $0x20] sm:$0xff]
    %v346 = vld [vmem:[%s3 + $0x28] sm:$0xff]
    %v347 = vld [vmem:[%s3 + $0x30] sm:$0xff]
    %v348 = vld [vmem:[%s3 + $0x38] sm:$0xff]
    %v349 = vld [vmem:[%s3 + $0x40] sm:$0xff]
    %v350 = vld [vmem:[%s3 + $0x48] sm:$0xff]
    %v351 = vld [vmem:[%s3 + $0x50] sm:$0xff]
    %v352 = vld [vmem:[%s3 + $0x58] sm:$0xff]
    %v353 = vld [vmem:[%s3 + $0x60] sm:$0xff]
    %v354 = vld [vmem:[%s3 + $0x68] sm:$0xff]
    %v355 = vld [vmem:[%s3 + $0x70] sm:$0xff]
    %v356 = vld [vmem:[%s3 + $0x78] sm:$0xff]
    %v357 = vld [vmem:[%s4] sm:$0x1]
    %v359 = vlaneseq
    %v360 = vshrl.u32 %v359, 7
    %v361 = vsub.s32 0, %v360
    %v362 = vrot.slane %v357, %v361
    %364 = vmatprep.subr.mxu0 0.0
    %365 = vmatpush1.msra.mxu0 %v356
    %366 = vmatprep.subr.mxu0 0.0
    %367 = vmatpush1.msra.mxu0 %v355
    %368 = vmatprep.subr.mxu0 0.0
    %369 = vmatpush1.msra.mxu0 %v354
    %370 = vmatprep.subr.mxu0 0.0
    %371 = vmatpush1.msra.mxu0 %v353
    %372 = vmatprep.subr.mxu0 0.0
    %373 = vmatpush1.msra.mxu0 %v352
    %374 = vmatprep.subr.mxu0 0.0
    %375 = vmatpush1.msra.mxu0 %v351
    %376 = vmatprep.subr.mxu0 0.0
    %377 = vmatpush1.msra.mxu0 %v350
    %378 = vmatprep.subr.mxu0 0.0
    %379 = vmatpush1.msra.mxu0 %v349
    %380 = vmatprep.subr.mxu0 0.0
    %381 = vmatpush1.msra.mxu0 %v348
    %382 = vmatprep.subr.mxu0 0.0
    %383 = vmatpush1.msra.mxu0 %v347
    %384 = vmatprep.subr.mxu0 0.0
    %385 = vmatpush1.msra.mxu0 %v346
    %386 = vmatprep.subr.mxu0 0.0
    %387 = vmatpush1.msra.mxu0 %v345
    %388 = vmatprep.subr.mxu0 0.0
    %389 = vmatpush1.msra.mxu0 %v344
    %390 = vmatprep.subr.mxu0 0.0
    %391 = vmatpush1.msra.mxu0 %v343
    %392 = vmatprep.subr.mxu0 0.0
    %393 = vmatpush1.msra.mxu0 %v342
    %394 = vmatprep.subr.mxu0 0.0
    %395 = vmatpush1.msra.mxu0 %v341
    %396 = vmatprep.subr.mxu0 0.0
    %397 = vmatpush2.msra.mxu0 0.0
    %398 = vmatprep.subr.mxu0 0.0
    %399 = vmatpush2.msra.mxu0 0.0
    %400 = vmatprep.subr.mxu0 0.0
    %401 = vmatpush2.msra.mxu0 0.0
    %402 = vmatprep.subr.mxu0 0.0
    %403 = vmatpush2.msra.mxu0 0.0
    %404 = vmatprep.subr.mxu0 0.0
    %405 = vmatpush2.msra.mxu0 0.0
    %406 = vmatprep.subr.mxu0 0.0
    %407 = vmatpush2.msra.mxu0 0.0
    %408 = vmatprep.subr.mxu0 0.0
    %409 = vmatpush2.msra.mxu0 0.0
    %410 = vmatprep.subr.mxu0 0.0
    %411 = vmatpush2.msra.mxu0 0.0
    %412 = vmatprep.subr.mxu0 0.0
    %413 = vmatpush2.msra.mxu0 0.0
    %414 = vmatprep.subr.mxu0 0.0
    %415 = vmatpush2.msra.mxu0 0.0
    %416 = vmatprep.subr.mxu0 0.0
    %417 = vmatpush2.msra.mxu0 0.0
    %418 = vmatprep.subr.mxu0 0.0
    %419 = vmatpush2.msra.mxu0 0.0
    %420 = vmatprep.subr.mxu0 0.0
    %421 = vmatpush2.msra.mxu0 0.0
    %422 = vmatprep.subr.mxu0 0.0
    %423 = vmatpush2.msra.mxu0 0.0
    %424 = vmatprep.subr.mxu0 0.0
    %425 = vmatpush2.msra.mxu0 0.0
    %426 = vmatprep.subr.mxu0 0.0
    %427 = vmatpush2.msra.mxu0 0.0
    %428 = vmatprep.mubr.f32.mxu0 0.0
    %429 = vmatmul.mubr.f32.gmra.mxu0 %v340
    %v430 = vpop.f32.mrf.mxu0
    %v431 = vadd.f32 %v362, %v430
    %v432 = vpop.f32.mrf.mxu0
    %433 = vdwg.mxu0
    %434 = vst [vmem:[#allocation2] sm:$0xff] %v431
    // Predicated region
    $region22: #{mlp_forward.1} parent=1 // pred_check
      _
    $region23: #{mlp_forward.1} parent=1 // pred_check_branch
      %436 = sbr.rel (0) target = $region25
    $region24: #{mlp_forward.1} parent=1 // pred_region
      %s438 = ssub.s32 128, 128
      %439 = vsyncadd [#allocation3], %s438
      %s441 = sshll.u32 [#allocation2], 4
      %s442 = int_to_ptr.vmem [resolvable:$true] %s441
      %444 = dma.vmem_to_hbm [thread:$0]  %s442, 128, %s5, [#allocation3]
    $region25: #{mlp_forward.1} parent=1 // pred_fallthru
      _
    // Predicated region
    $region26: #{mlp_forward.1} parent=1 // pred_check
      _
    $region27: #{mlp_forward.1} parent=1 // pred_check_branch
      %446 = sbr.rel (0) target = $region29
    $region28: #{mlp_forward.1} parent=1 // pred_region
      %447 = dma.done [#allocation3], 128
    $region29: #{mlp_forward.1} parent=1 // pred_fallthru
      _
    %448 = vsyncpa [#allocation3], 1

</llo_original>
